<compile_context>
chip_gen: v5e
topology: v5e:2x2
jax: 0.10.0
libtpu: 0.0.40
codegen_flags: <defaults>
</compile_context>

<pallas_src>
import functools

import jax
import jax.numpy as jnp
from jax.experimental import pallas as pl
from jax.experimental.pallas import tpu as pltpu

LANES = 128
# (4096, 128) f32 block = 2 MiB. 2 inputs x 2 pipeline buffers ~= 8 MiB VMEM.
MAX_TILE_ROWS = 4096


def _round_up(x, m):
    return (x + m - 1) // m * m


def _num_tensorcores():
    """Best-effort TensorCore count (for the v7x core-parallel split).

    Falls back to 1 (single-core path), which is also the right answer on
    v5e / v6e. Capped at 2 - no current chip has more TCs per chip.
    """
    try:
        info = pltpu.get_tpu_info()
    except Exception:
        return 1
    for name in ("num_cores", "core_count", "num_tensorcores",
                 "num_tensor_cores"):
        v = getattr(info, name, None)
        if isinstance(v, int) and v > 0:
            return min(v, 2)
    return 1


def _dice_partials_kernel(x_ref, y_ref, inter_out_ref, s_out_ref,
                          inter_acc, s_acc, *,
                          tile_rows, tiles_per_split, total_rows,
                          needs_mask, split_grid):
    if split_grid:
        p = pl.program_id(0)       # split index (one per TensorCore)
        i = pl.program_id(1)       # row-tile index within the split
        n_i = pl.num_programs(1)
    else:
        p = 0
        i = pl.program_id(0)
        n_i = pl.num_programs(0)
    t = p * tiles_per_split + i    # nominal (unclamped) tile index

    @pl.when(i == 0)
    def _():
        inter_acc[...] = jnp.zeros_like(inter_acc)
        s_acc[...] = jnp.zeros_like(s_acc)

    def accumulate(apply_mask):
        xv = x_ref[...].astype(jnp.float32)
        yv = y_ref[...].astype(jnp.float32)
        xy = xv * yv
        sv = xv + yv
        if apply_mask:
            # NOTE(correctness): rows at/after `total_rows` come from Pallas'
            # ragged-edge padding or clamped redundant blocks and hold
            # undefined data. Every quantity derived from them MUST pass
            # through this select before being accumulated.
            row0 = t * tile_rows
            rid = row0 + jax.lax.broadcasted_iota(jnp.int32, xy.shape, 0)
            valid = rid < total_rows
            xy = jnp.where(valid, xy, 0.0)
            sv = jnp.where(valid, sv, 0.0)
        # Sublane fold to a single (8, 128) vreg per accumulator: pure VALU
        # adds, fully hidden under the input DMA.
        inter_acc[...] += xy.reshape(-1, 8, LANES).sum(axis=0)
        s_acc[...] += sv.reshape(-1, 8, LANES).sum(axis=0)

    if needs_mask:
        # Only the last real tile / redundant split tiles pay for the mask.
        tile_end = (t + 1) * tile_rows

        @pl.when(tile_end <= total_rows)
        def _():
            accumulate(False)

        @pl.when(tile_end > total_rows)
        def _():
            accumulate(True)
    else:
        accumulate(False)

    @pl.when(i == n_i - 1)
    def _():
        # Emit the raw (8, 128) partials; the tiny final reduce + dice formula
        # happen in the wrapper (avoids in-kernel scalar/block construction).
        inter_out_ref[0] = inter_acc[...]
        s_out_ref[0] = s_acc[...]


def dice_loss(inputs, targets, eps=1e-6, num_cores=None):
    """Pallas TPU implementation of DiceLoss.forward (returns a 0-d f32)."""
    x = jnp.ravel(inputs)
    y = jnp.ravel(targets)
    n = x.shape[0]

    rows = n // LANES
    rem = n - rows * LANES

    inter = jnp.float32(0.0)
    s = jnp.float32(0.0)

    if rows > 0:
        m = rows * LANES
        # TODO(synk): when n % 128 != 0 the prefix slice below makes XLA
        # materialize a copy of the flattened input before the kernel (custom
        # call operands can't be strided views). The common 128-aligned case
        # is a pure reshape (no copy).
        xb = x if m == n else x[:m]
        yb = y if m == n else y[:m]
        x2 = xb.reshape(rows, LANES)
        y2 = yb.reshape(rows, LANES)

        tile_rows = min(MAX_TILE_ROWS, _round_up(rows, 8))
        num_tiles = pl.cdiv(rows, tile_rows)

        n_cores = num_cores if num_cores is not None else _num_tensorcores()
        core_parallel = getattr(pltpu, "CORE_PARALLEL", None)
        split_grid = (n_cores > 1 and core_parallel is not None
                      and num_tiles >= n_cores)
        n_splits = n_cores if split_grid else 1
        tiles_per_split = pl.cdiv(num_tiles, n_splits)
        covered_rows = n_splits * tiles_per_split * tile_rows
        needs_mask = covered_rows != rows

        kernel = functools.partial(
            _dice_partials_kernel,
            tile_rows=tile_rows,
            tiles_per_split=tiles_per_split,
            total_rows=rows,
            needs_mask=needs_mask,
            split_grid=split_grid,
        )

        if split_grid:
            grid = (n_splits, tiles_per_split)

            def in_map(p, i):
                # Clamp so redundant tiles (ragged split) never index past the
                # last real block; their contribution is zeroed by the mask.
                return (jnp.minimum(p * tiles_per_split + i, num_tiles - 1), 0)

            out_map = lambda p, i: (p, 0, 0)
            dim_sem = (core_parallel, pltpu.ARBITRARY)
        else:
            grid = (tiles_per_split,)
            in_map = lambda i: (i, 0)
            out_map = lambda i: (0, 0, 0)
            dim_sem = (pltpu.ARBITRARY,)

        inter_p, s_p = pl.pallas_call(
            kernel,
            out_shape=(
                jax.ShapeDtypeStruct((n_splits, 8, LANES), jnp.float32),
                jax.ShapeDtypeStruct((n_splits, 8, LANES), jnp.float32),
            ),
            grid_spec=pltpu.PrefetchScalarGridSpec(
                num_scalar_prefetch=0,
                grid=grid,
                in_specs=[
                    pl.BlockSpec((tile_rows, LANES), in_map),
                    pl.BlockSpec((tile_rows, LANES), in_map),
                ],
                out_specs=[
                    pl.BlockSpec((1, 8, LANES), out_map),
                    pl.BlockSpec((1, 8, LANES), out_map),
                ],
                scratch_shapes=[
                    pltpu.VMEM((8, LANES), jnp.float32),
                    pltpu.VMEM((8, LANES), jnp.float32),
                ],
            ),
            compiler_params=pltpu.CompilerParams(
                dimension_semantics=dim_sem,
                vmem_limit_bytes=32 * 1024 * 1024,
            ),
        )(x2, y2)

        inter = inter + jnp.sum(inter_p)
        s = s + jnp.sum(s_p)

    if rem:
        # Tiny (<128 element) tail handled in plain JAX; avoids padding the
        # whole array in HBM.
        xt = x[rows * LANES:].astype(jnp.float32)
        yt = y[rows * LANES:].astype(jnp.float32)
        inter = inter + jnp.sum(xt * yt)
        s = s + jnp.sum(xt) + jnp.sum(yt)

    return 1.0 - (2.0 * inter + eps) / (s + eps)


def dice_loss_ref(inputs, targets, eps=1e-6):
    x = jnp.ravel(inputs).astype(jnp.float32)
    y = jnp.ravel(targets).astype(jnp.float32)
    inter = jnp.sum(x * y)
    return 1.0 - (2.0 * inter + eps) / (jnp.sum(x) + jnp.sum(y) + eps)


if __name__ == "__main__":
    key = jax.random.PRNGKey(0)
    k1, k2, k3, k4 = jax.random.split(key, 4)

    # NCHW-shaped inputs (sigmoid probs) and binary targets, like a seg head.
    inputs = jax.nn.sigmoid(jax.random.normal(k1, (2, 4, 16, 16), jnp.float32))
    targets = (jax.random.uniform(k2, (2, 4, 16, 16)) > 0.5).astype(jnp.float32)

    loss = jax.block_until_ready(dice_loss(inputs, targets))
    ref = jax.block_until_ready(dice_loss_ref(inputs, targets))
    assert jnp.allclose(loss, ref, atol=1e-5, rtol=1e-5), (loss, ref)

    # Ragged size (n % 128 != 0) exercises the masked tile + JAX tail path.
    inputs_r = jax.nn.sigmoid(jax.random.normal(k3, (3, 5, 7, 11), jnp.float32))
    targets_r = (jax.random.uniform(k4, (3, 5, 7, 11)) > 0.5).astype(jnp.float32)

    loss_r = jax.block_until_ready(dice_loss(inputs_r, targets_r))
    ref_r = jax.block_until_ready(dice_loss_ref(inputs_r, targets_r))
    assert jnp.allclose(loss_r, ref_r, atol=1e-5, rtol=1e-5), (loss_r, ref_r)

    print("KERNEL_OK")
</pallas_src>

<mosaic_0001>
module attributes {stable_mosaic.version = 11 : i64} {
  func.func @_dice_partials_kernel(%arg0: i32, %arg1: memref<16x128xf32, #tpu.memory_space<vmem>>, %arg2: memref<16x128xf32, #tpu.memory_space<vmem>>, %arg3: memref<1x8x128xf32, #tpu.memory_space<vmem>>, %arg4: memref<1x8x128xf32, #tpu.memory_space<vmem>>, %arg5: memref<8x128xf32, #tpu.memory_space<vmem>>, %arg6: memref<8x128xf32, #tpu.memory_space<vmem>>) attributes {dimension_semantics = [#tpu.dimension_semantics<arbitrary>], iteration_bounds = array<i64: 1>, scalar_prefetch = 0 : i64, scratch_operands = 2 : i64, tpu.core_type = #tpu.core_type<tc>, window_params = [{transform_indices = @transform_0, window_bounds = array<i64: 16, 128>}, {transform_indices = @transform_1, window_bounds = array<i64: 16, 128>}, {pipeline_mode = #tpu.pipeline_mode<synchronous>, transform_indices = @transform_2, window_bounds = array<i64: 1, 8, 128>}, {pipeline_mode = #tpu.pipeline_mode<synchronous>, transform_indices = @transform_3, window_bounds = array<i64: 1, 8, 128>}]} {
    %c0_i32 = arith.constant 0 : i32
    %0 = arith.cmpi eq, %arg0, %c0_i32 : i32
    %1 = arith.extui %0 : i1 to i32
    %c0_i32_0 = arith.constant 0 : i32
    %2 = arith.cmpi ne, %1, %c0_i32_0 : i32
    scf.if %2 {
      %cst_15 = arith.constant 0.000000e+00 : f32
      %20 = vector.broadcast %cst_15 : f32 to vector<8x128xf32>
      %c0_16 = arith.constant 0 : index
      %c0_17 = arith.constant 0 : index
      %21 = vector.load %arg5[%c0_16, %c0_17] : memref<8x128xf32, #tpu.memory_space<vmem>>, vector<8x128xf32>
      tpu.vector_store %arg5[%c0_16, %c0_17], %20 {strides = array<i32>} : memref<8x128xf32, #tpu.memory_space<vmem>>, vector<8x128xf32>,
      %cst_18 = arith.constant 0.000000e+00 : f32
      %22 = vector.broadcast %cst_18 : f32 to vector<8x128xf32>
      %c0_19 = arith.constant 0 : index
      %c0_20 = arith.constant 0 : index
      %23 = vector.load %arg6[%c0_19, %c0_20] : memref<8x128xf32, #tpu.memory_space<vmem>>, vector<8x128xf32>
      tpu.vector_store %arg6[%c0_19, %c0_20], %22 {strides = array<i32>} : memref<8x128xf32, #tpu.memory_space<vmem>>, vector<8x128xf32>,
    } else {
    }
    %c0 = arith.constant 0 : index
    %c0_1 = arith.constant 0 : index
    %3 = vector.load %arg1[%c0, %c0_1] : memref<16x128xf32, #tpu.memory_space<vmem>>, vector<16x128xf32>
    %c0_2 = arith.constant 0 : index
    %c0_3 = arith.constant 0 : index
    %4 = vector.load %arg2[%c0_2, %c0_3] : memref<16x128xf32, #tpu.memory_space<vmem>>, vector<16x128xf32>
    %5 = arith.mulf %3, %4 : vector<16x128xf32>
    %6 = arith.addf %3, %4 : vector<16x128xf32>
    %c0_4 = arith.constant 0 : index
    %c0_5 = arith.constant 0 : index
    %7 = vector.load %arg5[%c0_4, %c0_5] : memref<8x128xf32, #tpu.memory_space<vmem>>, vector<8x128xf32>
    %8 = vector.shape_cast %5 : vector<16x128xf32> to vector<2x8x128xf32>
    %cst = arith.constant dense<0.000000e+00> : vector<8x128xf32>
    %9 = vector.multi_reduction <add>, %8, %cst [0] : vector<2x8x128xf32> to vector<8x128xf32>
    %10 = arith.addf %7, %9 : vector<8x128xf32>
    %c0_6 = arith.constant 0 : index
    %c0_7 = arith.constant 0 : index
    %11 = vector.load %arg5[%c0_6, %c0_7] : memref<8x128xf32, #tpu.memory_space<vmem>>, vector<8x128xf32>
    tpu.vector_store %arg5[%c0_6, %c0_7], %10 {strides = array<i32>} : memref<8x128xf32, #tpu.memory_space<vmem>>, vector<8x128xf32>,
    %c0_8 = arith.constant 0 : index
    %c0_9 = arith.constant 0 : index
    %12 = vector.load %arg6[%c0_8, %c0_9] : memref<8x128xf32, #tpu.memory_space<vmem>>, vector<8x128xf32>
    %13 = vector.shape_cast %6 : vector<16x128xf32> to vector<2x8x128xf32>
    %cst_10 = arith.constant dense<0.000000e+00> : vector<8x128xf32>
    %14 = vector.multi_reduction <add>, %13, %cst_10 [0] : vector<2x8x128xf32> to vector<8x128xf32>
    %15 = arith.addf %12, %14 : vector<8x128xf32>
    %c0_11 = arith.constant 0 : index
    %c0_12 = arith.constant 0 : index
    %16 = vector.load %arg6[%c0_11, %c0_12] : memref<8x128xf32, #tpu.memory_space<vmem>>, vector<8x128xf32>
    tpu.vector_store %arg6[%c0_11, %c0_12], %15 {strides = array<i32>} : memref<8x128xf32, #tpu.memory_space<vmem>>, vector<8x128xf32>,
    %c0_i32_13 = arith.constant 0 : i32
    %17 = arith.cmpi eq, %arg0, %c0_i32_13 : i32
    %18 = arith.extui %17 : i1 to i32
    %c0_i32_14 = arith.constant 0 : i32
    %19 = arith.cmpi ne, %18, %c0_i32_14 : i32
    scf.if %19 {
      %c0_15 = arith.constant 0 : index
      %c0_16 = arith.constant 0 : index
      %20 = vector.load %arg5[%c0_15, %c0_16] : memref<8x128xf32, #tpu.memory_space<vmem>>, vector<8x128xf32>
      %c0_17 = arith.constant 0 : index
      %c0_18 = arith.constant 0 : index
      %c0_19 = arith.constant 0 : index
      %21 = vector.load %arg3[%c0_17, %c0_18, %c0_19] : memref<1x8x128xf32, #tpu.memory_space<vmem>>, vector<1x8x128xf32>
      %22 = vector.shape_cast %21 : vector<1x8x128xf32> to vector<8x128xf32>
      %23 = vector.shape_cast %20 : vector<8x128xf32> to vector<1x8x128xf32>
      tpu.vector_store %arg3[%c0_17, %c0_18, %c0_19], %23 {strides = array<i32>} : memref<1x8x128xf32, #tpu.memory_space<vmem>>, vector<1x8x128xf32>,
      %c0_20 = arith.constant 0 : index
      %c0_21 = arith.constant 0 : index
      %24 = vector.load %arg6[%c0_20, %c0_21] : memref<8x128xf32, #tpu.memory_space<vmem>>, vector<8x128xf32>
      %c0_22 = arith.constant 0 : index
      %c0_23 = arith.constant 0 : index
      %c0_24 = arith.constant 0 : index
      %25 = vector.load %arg4[%c0_22, %c0_23, %c0_24] : memref<1x8x128xf32, #tpu.memory_space<vmem>>, vector<1x8x128xf32>
      %26 = vector.shape_cast %25 : vector<1x8x128xf32> to vector<8x128xf32>
      %27 = vector.shape_cast %24 : vector<8x128xf32> to vector<1x8x128xf32>
      tpu.vector_store %arg4[%c0_22, %c0_23, %c0_24], %27 {strides = array<i32>} : memref<1x8x128xf32, #tpu.memory_space<vmem>>, vector<1x8x128xf32>,
    } else {
    }
    return
  }
  func.func @transform_0(%arg0: i32) -> (i32, i32) {
    %c0_i32 = arith.constant 0 : i32
    %c0_i32_0 = arith.constant 0 : i32
    return %arg0, %c0_i32 : i32, i32
  }
  func.func @transform_1(%arg0: i32) -> (i32, i32) {
    %c0_i32 = arith.constant 0 : i32
    %c0_i32_0 = arith.constant 0 : i32
    return %arg0, %c0_i32 : i32, i32
  }
  func.func @transform_2(%arg0: i32) -> (i32, i32, i32) {
    %c0_i32 = arith.constant 0 : i32
    %c0_i32_0 = arith.constant 0 : i32
    %c0_i32_1 = arith.constant 0 : i32
    %c0_i32_2 = arith.constant 0 : i32
    return %c0_i32, %c0_i32_0, %c0_i32_1 : i32, i32, i32
  }
  func.func @transform_3(%arg0: i32) -> (i32, i32, i32) {
    %c0_i32 = arith.constant 0 : i32
    %c0_i32_0 = arith.constant 0 : i32
    %c0_i32_1 = arith.constant 0 : i32
    %c0_i32_2 = arith.constant 0 : i32
    return %c0_i32, %c0_i32_0, %c0_i32_1 : i32, i32, i32
  }
}

</mosaic_0001>

<llo_original>
// kernel: tpu_custom_call.1
$region0: #{tpu_custom_call.1}
  #allocation0 [shape = 'u32[]', space=smem, size = 0x4, offset = 0x4, fixed_abs, tag = 'smem constant byte address 0x4 - core index']
  #allocation1 [shape = 'u32[72,128]{1,0:T(1,128)}', space=vmem, size = 0x9000, scoped, tag = 'internal scratch']
  #allocation2 [shape = 'f32[8,128]{1,0:T(8,128)}', space=vmem, size = 0x1000, scoped, tag = 'scratch operand']
  #allocation3 [shape = 'f32[8,128]{1,0:T(8,128)}', space=vmem, size = 0x1000, scoped, tag = 'scratch operand']
  %s0 = inlined_call_operand.hbm [shape: f32[16,128], index: 0, kind: input, shape index: {}]
  %s1 = inlined_call_operand.hbm [shape: f32[16,128], index: 1, kind: input, shape index: {}]
  %s2 = inlined_call_operand.hbm [shape: f32[1,8,128], index: 2, kind: output, shape index: {0}]
  %s3 = inlined_call_operand.hbm [shape: f32[1,8,128], index: 3, kind: output, shape index: {1}]
  %4 = xla_tuple %s2, %s3
  %s5 = sld [smem:[#allocation0]]
  $region42: #{tpu_custom_call.1} parent=0
    _
  %s7 = ssub.s32 1, %s5
  %s8 = scalar_select 0, %s7, %s5
  $region1: #{tpu_custom_call.1} parent=0
    #allocation4 [shape = 'u8[8192]{0}', space=vmem, size = 0x2000, scoped, tag = 'input window, operand 0, single buffered']
    #allocation5 [shape = 's32[1]{0}', space=sflag, size = 0x4, scoped, tag = 'scoped memory for tpu_custom_call.1']
    #allocation6 [shape = 's32[1]{0}', space=sflag, size = 0x4, scoped, tag = 'scoped memory for tpu_custom_call.1']
    #allocation7 [shape = 'u8[8192]{0}', space=vmem, size = 0x2000, scoped, tag = 'input window, operand 1, single buffered']
    #allocation8 [shape = 's32[1]{0}', space=sflag, size = 0x4, scoped, tag = 'scoped memory for tpu_custom_call.1']
    #allocation9 [shape = 'u8[4096]{0}', space=vmem, size = 0x1000, scoped, tag = 'output window, operand 0, single buffered']
    #allocation10 [shape = 'u8[4096]{0}', space=vmem, size = 0x1000, scoped, tag = 'output window, operand 1, single buffered']
    #allocation11 [shape = 's32[1]{0}', space=sflag, size = 0x4, scoped, tag = 'scoped memory for tpu_custom_call.1']
    %9 = vsyncpa [#allocation5], 0
    %10 = vsyncpa [#allocation8], 0
    %11 = vsyncpa [#allocation6], 0
    %12 = vsyncpa [#allocation11], 0
    // Predicated region
    $region2: #{tpu_custom_call.1} parent=1 // pred_check
      _
    $region3: #{tpu_custom_call.1} parent=1 // pred_check_branch
      %14 = sbr.rel (0) target = $region5
    $region4: #{tpu_custom_call.1} parent=1 // pred_region
      %16 = vsyncadd [#allocation5], 0
      %s17 = sshll.u32 %s0, 4
      %s18 = int_to_ptr.hbm [resolvable:$true] %s17
      %s19 = sshll.u32 [#allocation4], 4
      %s20 = int_to_ptr.vmem [resolvable:$true] %s19
      %25 = dma.hbm_to_vmem [thread:$0]  %s18, 256, %s20, [#allocation5], 128, 128, 8
    $region5: #{tpu_custom_call.1} parent=1 // pred_fallthru
      _
    // Predicated region
    $region6: #{tpu_custom_call.1} parent=1 // pred_check
      _
    $region7: #{tpu_custom_call.1} parent=1 // pred_check_branch
      %27 = sbr.rel (0) target = $region9
    $region8: #{tpu_custom_call.1} parent=1 // pred_region
      %29 = vsyncadd [#allocation8], 0
      %s30 = sshll.u32 %s1, 4
      %s31 = int_to_ptr.hbm [resolvable:$true] %s30
      %s32 = sshll.u32 [#allocation7], 4
      %s33 = int_to_ptr.vmem [resolvable:$true] %s32
      %38 = dma.hbm_to_vmem [thread:$0]  %s31, 256, %s33, [#allocation8], 128, 128, 8
    $region9: #{tpu_custom_call.1} parent=1 // pred_fallthru
      _
    // Predicated region
    $region10: #{tpu_custom_call.1} parent=1 // pred_check
      _
    $region11: #{tpu_custom_call.1} parent=1 // pred_check_branch
      %40 = sbr.rel (0) target = $region13
    $region12: #{tpu_custom_call.1} parent=1 // pred_region
      %42 = dma.done [#allocation5], 256
    $region13: #{tpu_custom_call.1} parent=1 // pred_fallthru
      _
    // Predicated region
    $region14: #{tpu_custom_call.1} parent=1 // pred_check
      _
    $region15: #{tpu_custom_call.1} parent=1 // pred_check_branch
      %44 = sbr.rel (0) target = $region17
    $region16: #{tpu_custom_call.1} parent=1 // pred_region
      %46 = dma.done [#allocation8], 256
    $region17: #{tpu_custom_call.1} parent=1 // pred_fallthru
      _
    %p47 = scmp.eq.s32.totalorder 0, 0
    // Predicated region
    $region18: #{tpu_custom_call.1} parent=1 // pred_check
      %p48 = pneg %p47
    $region19: #{tpu_custom_call.1} parent=1 // pred_check_branch
      %50 = sbr.rel (%p48) target = $region21
    $region20: #{tpu_custom_call.1} parent=1 // pred_region
      %51 = vst [vmem:[#allocation2] sm:$0xff] 0.0
      %52 = vst [vmem:[#allocation3] sm:$0xff] 0.0
    $region21: #{tpu_custom_call.1} parent=1 // pred_fallthru
      _
    %v53 = vld [vmem:[#allocation4] sm:$0xff]
    %v54 = vld [vmem:[#allocation4 + $0x8] sm:$0xff]
    %v55 = vld [vmem:[#allocation7] sm:$0xff]
    %v56 = vld [vmem:[#allocation7 + $0x8] sm:$0xff]
    %v57 = vmul.f32 %v53, %v55
    %v58 = vmul.f32 %v54, %v56
    %v59 = vadd.f32 %v53, %v55
    %v60 = vadd.f32 %v54, %v56
    %v61 = vld [vmem:[#allocation2] sm:$0xff]
    %v62 = vadd.f32 %v57, %v58
    %v63 = vadd.f32 %v61, %v62
    %64 = vst [vmem:[#allocation2] sm:$0xff] %v63
    %v65 = vld [vmem:[#allocation3] sm:$0xff]
    %v66 = vadd.f32 %v59, %v60
    %v67 = vadd.f32 %v65, %v66
    %68 = vst [vmem:[#allocation3] sm:$0xff] %v67
    // Predicated region
    $region22: #{tpu_custom_call.1} parent=1 // pred_check
      %p69 = pneg %p47
    $region23: #{tpu_custom_call.1} parent=1 // pred_check_branch
      %71 = sbr.rel (%p69) target = $region25
    $region24: #{tpu_custom_call.1} parent=1 // pred_region
      %v72 = vld [vmem:[#allocation2] sm:$0xff]
      %73 = vst [vmem:[#allocation9] sm:$0xff] %v72
      %v74 = vld [vmem:[#allocation3] sm:$0xff]
      %75 = vst [vmem:[#allocation10] sm:$0xff] %v74
    $region25: #{tpu_custom_call.1} parent=1 // pred_fallthru
      _
    // Predicated region
    $region26: #{tpu_custom_call.1} parent=1 // pred_check
      _
    $region27: #{tpu_custom_call.1} parent=1 // pred_check_branch
      %77 = sbr.rel (0) target = $region29
    $region28: #{tpu_custom_call.1} parent=1 // pred_region
      %79 = vsyncadd [#allocation6], 0
      %s81 = sshll.u32 [#allocation9], 4
      %s82 = int_to_ptr.vmem [resolvable:$true] %s81
      %s83 = sshll.u32 %s2, 4
      %s84 = int_to_ptr.hbm [resolvable:$true] %s83
      %86 = dma.vmem_to_hbm [thread:$0]  %s82, 128, %s84, [#allocation6]
    $region29: #{tpu_custom_call.1} parent=1 // pred_fallthru
      _
    // Predicated region
    $region30: #{tpu_custom_call.1} parent=1 // pred_check
      _
    $region31: #{tpu_custom_call.1} parent=1 // pred_check_branch
      %88 = sbr.rel (0) target = $region33
    $region32: #{tpu_custom_call.1} parent=1 // pred_region
      %90 = vsyncadd [#allocation11], 0
      %s92 = sshll.u32 [#allocation10], 4
      %s93 = int_to_ptr.vmem [resolvable:$true] %s92
      %s94 = sshll.u32 %s3, 4
      %s95 = int_to_ptr.hbm [resolvable:$true] %s94
      %97 = dma.vmem_to_hbm [thread:$0]  %s93, 128, %s95, [#allocation11]
    $region33: #{tpu_custom_call.1} parent=1 // pred_fallthru
      _
    // Predicated region
    $region34: #{tpu_custom_call.1} parent=1 // pred_check
      _
    $region35: #{tpu_custom_call.1} parent=1 // pred_check_branch
      %99 = sbr.rel (0) target = $region37
    $region36: #{tpu_custom_call.1} parent=1 // pred_region
      %101 = dma.done [#allocation6], 128
    $region37: #{tpu_custom_call.1} parent=1 // pred_fallthru
      _
    // Predicated region
    $region38: #{tpu_custom_call.1} parent=1 // pred_check
      _
    $region39: #{tpu_custom_call.1} parent=1 // pred_check_branch
      %103 = sbr.rel (0) target = $region41
    $region40: #{tpu_custom_call.1} parent=1 // pred_region
      %105 = dma.done [#allocation11], 128
    $region41: #{tpu_custom_call.1} parent=1 // pred_fallthru
      _
    %106 = vsyncpa [#allocation5], 1
    %107 = vsyncpa [#allocation8], 1
    %108 = vsyncpa [#allocation6], 1
    %109 = vsyncpa [#allocation11], 1

</llo_original>
